<compile_context>
chip_gen: v7x
topology: tpu7x:2x2x1
jax: 0.10.0
libtpu: 0.0.40
codegen_flags: <defaults>
</compile_context>

<pallas_src>
import functools

import jax
import jax.numpy as jnp
from jax.experimental import pallas as pl
from jax.experimental.pallas import tpu as pltpu


def _round_up(x, m):
    return (x + m - 1) // m * m


def _device_kind():
    try:
        return jax.devices()[0].device_kind.lower()
    except Exception:
        return ""


def _trunk_tile_k(repr_dim, tile_k):
    tile_k = max(128, _round_up(tile_k, 128))
    return repr_dim if repr_dim <= tile_k else tile_k


def _pad2(x, rows, cols):
    if x.shape == (rows, cols):
        return x
    return jnp.zeros((rows, cols), x.dtype).at[: x.shape[0], : x.shape[1]].set(x)


# --------------------------------------------------------------------------
# Kernel
# --------------------------------------------------------------------------
def _critic_kernel(
    obs_ref, act_ref,
    wt_ref, bt_ref, gamma_ref, beta_ref,
    w1h_ref, w1a_ref, b1_ref,
    q1_w2_ref, q1_b2_ref, q2_w2_ref, q2_b2_ref,
    q1_w3_ref, q1_b3_ref, q2_w3_ref, q2_b3_ref,
    out_ref,
    h_acc_ref,
    *, feature_dim, k_rem,
):
    """One (batch-tile, K-tile) grid step."""
    k = pl.program_id(1)
    n_k = pl.num_programs(1)
    mm_dtype = wt_ref.dtype

    @pl.when(k == 0)
    def _init():
        h_acc_ref[...] = jnp.zeros_like(h_acc_ref)

    # ----- trunk matmul for this K tile (f32 accumulation on the MXU) -----
    obs_t = obs_ref[...]
    if k_rem:  # static: repr_dim not a multiple of TILE_K -> mask garbage cols
        lim = jnp.where(k == n_k - 1, k_rem, obs_t.shape[1])
        col = jax.lax.broadcasted_iota(jnp.int32, obs_t.shape, 1)
        obs_t = jnp.where(col < lim, obs_t, 0)
    h_acc_ref[...] += jnp.dot(
        obs_t.astype(mm_dtype), wt_ref[...], preferred_element_type=jnp.float32
    )

    @pl.when(k == n_k - 1)
    def _finish():
        hidden_dim = q1_w2_ref.shape[0]
        f_pad = h_acc_ref.shape[-1]
        inv_f = 1.0 / feature_dim

        # ----- trunk tail: bias + LayerNorm (true feature_dim) + tanh -----
        h = h_acc_ref[...] + bt_ref[...]
        mean = jnp.sum(h, axis=-1, keepdims=True) * inv_f  # padded lanes are 0
        hc = h - mean
        if f_pad != feature_dim:  # mask padded lanes out of the variance
            lane = jax.lax.broadcasted_iota(jnp.int32, hc.shape, 1)
            hc = jnp.where(lane < feature_dim, hc, 0.0)
        var = jnp.sum(hc * hc, axis=-1, keepdims=True) * inv_f
        h = hc * jax.lax.rsqrt(var + 1e-5)
        h = h * gamma_ref[...] + beta_ref[...]   # padded gamma/beta are 0
        h = jnp.tanh(h)

        # ----- fused first layer of BOTH Q heads (concat folded into 2 dots)
        act = act_ref[...].astype(mm_dtype)
        x = (
            jnp.dot(h.astype(mm_dtype), w1h_ref[...],
                    preferred_element_type=jnp.float32)
            + jnp.dot(act, w1a_ref[...], preferred_element_type=jnp.float32)
            + b1_ref[...]
        )
        x = jnp.maximum(x, 0.0)
        x1 = x[:, :hidden_dim]
        x2 = x[:, hidden_dim:]

        def head_tail(xh, w2_ref, b2_ref, w3_ref, b3_ref):
            y = jnp.dot(xh.astype(mm_dtype), w2_ref[...],
                        preferred_element_type=jnp.float32) + b2_ref[...]
            y = jnp.maximum(y, 0.0)
            # hidden -> 1: VPU multiply + lane reduce instead of an N=1 MXU matmul
            return (jnp.sum(y * w3_ref[...].astype(jnp.float32),
                            axis=-1, keepdims=True) + b3_ref[...])

        q1 = head_tail(x1, q1_w2_ref, q1_b2_ref, q1_w3_ref, q1_b3_ref)
        q2 = head_tail(x2, q2_w2_ref, q2_b2_ref, q2_w3_ref, q2_b3_ref)
        out_ref[...] = jnp.concatenate([q1, q2], axis=-1).astype(out_ref.dtype)


# --------------------------------------------------------------------------
# Params: synthetic init + one-time packing (fusion / padding / casting)
# --------------------------------------------------------------------------
def init_critic_params(key, repr_dim, action_dim, feature_dim, hidden_dim):
    """Deterministic synthetic init (shapes match nn.Linear / nn.LayerNorm)."""
    ks = jax.random.split(key, 10)
    s = 0.1

    def w(k, shape):
        return (s * jax.random.normal(k, shape)).astype(jnp.float32)

    params = dict(
        wt=w(ks[0], (repr_dim, feature_dim)),
        bt=jnp.zeros((1, feature_dim), jnp.float32),
        gamma=jnp.ones((1, feature_dim), jnp.float32),   # LayerNorm weight
        beta=jnp.zeros((1, feature_dim), jnp.float32),   # LayerNorm bias
    )
    for name, koff in (("q1", 1), ("q2", 4)):
        w1 = w(ks[koff], (feature_dim + action_dim, hidden_dim))
        params[f"{name}_w1h"] = w1[:feature_dim]
        params[f"{name}_w1a"] = w1[feature_dim:]
        params[f"{name}_b1"] = jnp.zeros((1, hidden_dim), jnp.float32)
        params[f"{name}_w2"] = w(ks[koff + 1], (hidden_dim, hidden_dim))
        params[f"{name}_b2"] = jnp.zeros((1, hidden_dim), jnp.float32)
        params[f"{name}_w3"] = w(ks[koff + 2], (hidden_dim, 1))
        params[f"{name}_b3"] = jnp.zeros((1, 1), jnp.float32)
    return params


def pack_critic_params(params, *, matmul_dtype=jnp.bfloat16, tile_k=2048):
    """One-time weight packing (call at init, NOT per forward pass).

    * feature_dim padded to a lane-dense multiple of 128 (zero columns).
    * trunk weight padded along K to a multiple of TILE_K (zero rows).
    * both heads' first Linear fused along N: (F_pad, 2H) and (A, 2H).
    * matmul operands cast to `matmul_dtype`; LN/bias params stay f32.
    """
    repr_dim, feature_dim = params["wt"].shape
    action_dim = params["q1_w1a"].shape[0]
    hidden_dim = params["q1_w2"].shape[0]

    tk = _trunk_tile_k(repr_dim, tile_k)
    k_pad = _round_up(repr_dim, tk)
    f_pad = _round_up(feature_dim, 128)

    w1h = jnp.concatenate([params["q1_w1h"], params["q2_w1h"]], axis=1)
    w1a = jnp.concatenate([params["q1_w1a"], params["q2_w1a"]], axis=1)
    b1 = jnp.concatenate([params["q1_b1"], params["q2_b1"]], axis=1)

    return dict(
        wt=_pad2(params["wt"].astype(matmul_dtype), k_pad, f_pad),
        bt=_pad2(params["bt"], 1, f_pad),
        gamma=_pad2(params["gamma"], 1, f_pad),
        beta=_pad2(params["beta"], 1, f_pad),
        w1h=_pad2(w1h.astype(matmul_dtype), f_pad, 2 * hidden_dim),
        w1a=w1a.astype(matmul_dtype),
        b1=b1,
        q1_w2=params["q1_w2"].astype(matmul_dtype), q1_b2=params["q1_b2"],
        q2_w2=params["q2_w2"].astype(matmul_dtype), q2_b2=params["q2_b2"],
        q1_w3=params["q1_w3"].T, q1_b3=params["q1_b3"],   # (1, H), consumed on VPU
        q2_w3=params["q2_w3"].T, q2_b3=params["q2_b3"],
    )


# --------------------------------------------------------------------------
# Forward
# --------------------------------------------------------------------------
@functools.partial(
    jax.jit,
    static_argnames=("feature_dim", "tile_k", "max_tile_b",
                     "num_batch_tiles", "resident_buffer_count"),
)
def critic_forward(obs, action, packed, *, feature_dim, tile_k=2048,
                   max_tile_b=256, num_batch_tiles=None,
                   resident_buffer_count=None):
    B, repr_dim = obs.shape
    action_dim = action.shape[1]
    k_pad, f_pad = packed["wt"].shape
    hidden_dim = packed["q1_w2"].shape[0]

    kind = _device_kind()
    is_v7 = "7" in kind
    if num_batch_tiles is None:
        # v7x has 2 TensorCores per chip -> 2 batch tiles so both cores work;
        # single-TC chips (v5e/v6e) use one batch tile so Wt streams once.
        num_batch_tiles = 2 if is_v7 else 1

    # ---- tiling ----
    TILE_K = _trunk_tile_k(repr_dim, tile_k)
    assert k_pad == _round_up(repr_dim, TILE_K), "packed params / tile_k mismatch"
    n_k = pl.cdiv(repr_dim, TILE_K)
    k_rem = repr_dim - (n_k - 1) * TILE_K
    if k_rem == TILE_K:
        k_rem = 0

    TILE_B = min(max_tile_b, _round_up(max(1, pl.cdiv(B, num_batch_tiles)), 8))
    n_b = pl.cdiv(B, TILE_B)
    grid = (n_b, n_k)

    args = (
        obs, action,
        packed["wt"], packed["bt"], packed["gamma"], packed["beta"],
        packed["w1h"], packed["w1a"], packed["b1"],
        packed["q1_w2"], packed["q1_b2"], packed["q2_w2"], packed["q2_b2"],
        packed["q1_w3"], packed["q1_b3"], packed["q2_w3"], packed["q2_b3"],
    )

    resident_kwargs = {}
    if resident_buffer_count is not None:
        # e.g. resident_buffer_count=1 on v7x to reclaim VMEM (weights never
        # change block index, so double buffering them is pure waste).
        resident_kwargs = dict(pipeline_mode=pl.Buffered(resident_buffer_count))

    in_specs = [
        # activations: tiled over batch (and K for obs), original dtype,
        # cast to matmul dtype per-tile inside the kernel (no wrapper pass).
        pl.BlockSpec((TILE_B, TILE_K), lambda b, k: (b, k)),
        pl.BlockSpec((TILE_B, action_dim), lambda b, k: (b, 0)),
        # trunk weight: streamed over K, re-streamed only per batch tile
        pl.BlockSpec((TILE_K, f_pad), lambda b, k: (k, 0)),
    ] + [
        # every other weight/bias stays resident in VMEM across the grid
        pl.BlockSpec(a.shape, lambda b, k: (0, 0), **resident_kwargs)
        for a in args[3:]
    ]

    mm_itemsize = packed["wt"].dtype.itemsize
    resident_bytes = sum(int(a.size) * a.dtype.itemsize for a in args[3:])
    wt_bytes = int(packed["wt"].size) * mm_itemsize

    # cost model: Wt is DMA'd once per batch tile, everything else once.
    flops = 2 * n_b * TILE_B * (
        k_pad * f_pad
        + (f_pad + action_dim) * 2 * hidden_dim
        + 2 * hidden_dim * hidden_dim
        + 2 * hidden_dim
    )
    bytes_accessed = (
        int(obs.size) * obs.dtype.itemsize
        + int(action.size) * action.dtype.itemsize
        + wt_bytes * n_b
        + resident_bytes
        + B * 2 * 4
    )

    # VMEM: streamed tiles are double-buffered by BlockSpec; resident weights
    # take (resident_buffer_count or 2) copies; plus the f32 accumulator.
    vmem_est = (
        2 * TILE_B * TILE_K * obs.dtype.itemsize
        + 2 * TILE_K * f_pad * mm_itemsize
        + 2 * TILE_B * action_dim * action.dtype.itemsize
        + (resident_buffer_count or 2) * resident_bytes
        + TILE_B * f_pad * 4
        + 2 * TILE_B * 2 * 4
    )
    vmem_cap = (56 if is_v7 else 110) << 20   # v7x: 64 MiB physical; v5e/v6e: 128 MiB
    vmem_limit = int(min(vmem_cap, max(48 << 20, vmem_est + (8 << 20))))

    kernel = functools.partial(_critic_kernel, feature_dim=feature_dim, k_rem=k_rem)

    out = pl.pallas_call(
        kernel,
        out_shape=jax.ShapeDtypeStruct((B, 2), jnp.float32),
        grid_spec=pltpu.PrefetchScalarGridSpec(
            num_scalar_prefetch=0,
            grid=grid,
            in_specs=in_specs,
            out_specs=pl.BlockSpec((TILE_B, 2), lambda b, k: (b, 0)),
            scratch_shapes=[pltpu.VMEM((TILE_B, f_pad), jnp.float32)],
        ),
        compiler_params=pltpu.CompilerParams(
            dimension_semantics=("parallel", "arbitrary"),
            vmem_limit_bytes=vmem_limit,
        ),
        cost_estimate=pl.CostEstimate(
            flops=int(flops),
            transcendentals=int(n_b * TILE_B * f_pad),
            bytes_accessed=int(bytes_accessed),
        ),
    )(*args)

    return out[:, 0:1], out[:, 1:2]


# --------------------------------------------------------------------------
# Pure-JAX reference (matches the PyTorch module)
# --------------------------------------------------------------------------
def critic_forward_ref(obs, action, params):
    h = obs @ params["wt"] + params["bt"]
    mean = h.mean(-1, keepdims=True)
    var = ((h - mean) ** 2).mean(-1, keepdims=True)
    h = (h - mean) / jnp.sqrt(var + 1e-5) * params["gamma"] + params["beta"]
    h = jnp.tanh(h)
    ha = jnp.concatenate([h, action], axis=-1)

    def head(p):
        w1 = jnp.concatenate([params[f"{p}_w1h"], params[f"{p}_w1a"]], axis=0)
        x = jnp.maximum(ha @ w1 + params[f"{p}_b1"], 0.0)
        x = jnp.maximum(x @ params[f"{p}_w2"] + params[f"{p}_b2"], 0.0)
        return x @ params[f"{p}_w3"] + params[f"{p}_b3"]

    return head("q1"), head("q2")


if __name__ == "__main__":
    B, repr_dim, action_dim, feature_dim, hidden_dim = 8, 64, 4, 32, 32

    key = jax.random.PRNGKey(0)
    k_obs, k_act, k_params = jax.random.split(key, 3)
    obs = jax.random.normal(k_obs, (B, repr_dim), jnp.float32)
    action = jax.random.normal(k_act, (B, action_dim), jnp.float32)
    params = init_critic_params(k_params, repr_dim, action_dim, feature_dim, hidden_dim)

    q1_ref, q2_ref = critic_forward_ref(obs, action, params)

    # f32 matmul path: tight-ish numerical check against the pure-JAX reference.
    packed_f32 = pack_critic_params(params, matmul_dtype=jnp.float32)
    q1, q2 = critic_forward(obs, action, packed_f32, feature_dim=feature_dim)
    jax.block_until_ready((q1, q2))
    assert q1.shape == (B, 1) and q2.shape == (B, 1)
    assert jnp.allclose(q1, q1_ref, atol=1e-3, rtol=1e-3)
    assert jnp.allclose(q2, q2_ref, atol=1e-3, rtol=1e-3)

    # bf16 matmul path (production default for v5e/v6e/v7x MXU): loose check.
    packed_bf16 = pack_critic_params(params, matmul_dtype=jnp.bfloat16)
    q1b, q2b = critic_forward(obs, action, packed_bf16, feature_dim=feature_dim)
    jax.block_until_ready((q1b, q2b))
    assert q1b.shape == (B, 1) and q2b.shape == (B, 1)
    assert jnp.allclose(q1b, q1_ref, atol=5e-2, rtol=5e-2)
    assert jnp.allclose(q2b, q2_ref, atol=5e-2, rtol=5e-2)

    print("KERNEL_OK")
</pallas_src>

<mosaic_0001>
module attributes {stable_mosaic.version = 11 : i64} {
  func.func @_critic_kernel(%arg0: i32, %arg1: i32, %arg2: memref<8x64xf32, #tpu.memory_space<vmem>>, %arg3: memref<8x4xf32, #tpu.memory_space<vmem>>, %arg4: memref<64x128xf32, #tpu.memory_space<vmem>>, %arg5: memref<1x128xf32, #tpu.memory_space<vmem>>, %arg6: memref<1x128xf32, #tpu.memory_space<vmem>>, %arg7: memref<1x128xf32, #tpu.memory_space<vmem>>, %arg8: memref<128x64xf32, #tpu.memory_space<vmem>>, %arg9: memref<4x64xf32, #tpu.memory_space<vmem>>, %arg10: memref<1x64xf32, #tpu.memory_space<vmem>>, %arg11: memref<32x32xf32, #tpu.memory_space<vmem>>, %arg12: memref<1x32xf32, #tpu.memory_space<vmem>>, %arg13: memref<32x32xf32, #tpu.memory_space<vmem>>, %arg14: memref<1x32xf32, #tpu.memory_space<vmem>>, %arg15: memref<1x32xf32, #tpu.memory_space<vmem>>, %arg16: memref<1x1xf32, #tpu.memory_space<vmem>>, %arg17: memref<1x32xf32, #tpu.memory_space<vmem>>, %arg18: memref<1x1xf32, #tpu.memory_space<vmem>>, %arg19: memref<8x2xf32, #tpu.memory_space<vmem>>, %arg20: memref<8x128xf32, #tpu.memory_space<vmem>>) attributes {dimension_semantics = [#tpu.dimension_semantics<parallel>, #tpu.dimension_semantics<arbitrary>], iteration_bounds = array<i64: 1, 1>, scalar_prefetch = 0 : i64, scratch_operands = 1 : i64, tpu.core_type = #tpu.core_type<tc>, window_params = [{transform_indices = @transform_0, window_bounds = array<i64: 8, 64>}, {transform_indices = @transform_1, window_bounds = array<i64: 8, 4>}, {transform_indices = @transform_2, window_bounds = array<i64: 64, 128>}, {pipeline_mode = #tpu.pipeline_mode<synchronous>, transform_indices = @transform_3, window_bounds = array<i64: 1, 128>}, {pipeline_mode = #tpu.pipeline_mode<synchronous>, transform_indices = @transform_4, window_bounds = array<i64: 1, 128>}, {pipeline_mode = #tpu.pipeline_mode<synchronous>, transform_indices = @transform_5, window_bounds = array<i64: 1, 128>}, {pipeline_mode = #tpu.pipeline_mode<synchronous>, transform_indices = @transform_6, window_bounds = array<i64: 128, 64>}, {pipeline_mode = #tpu.pipeline_mode<synchronous>, transform_indices = @transform_7, window_bounds = array<i64: 4, 64>}, {pipeline_mode = #tpu.pipeline_mode<synchronous>, transform_indices = @transform_8, window_bounds = array<i64: 1, 64>}, {pipeline_mode = #tpu.pipeline_mode<synchronous>, transform_indices = @transform_9, window_bounds = array<i64: 32, 32>}, {pipeline_mode = #tpu.pipeline_mode<synchronous>, transform_indices = @transform_10, window_bounds = array<i64: 1, 32>}, {pipeline_mode = #tpu.pipeline_mode<synchronous>, transform_indices = @transform_11, window_bounds = array<i64: 32, 32>}, {pipeline_mode = #tpu.pipeline_mode<synchronous>, transform_indices = @transform_12, window_bounds = array<i64: 1, 32>}, {pipeline_mode = #tpu.pipeline_mode<synchronous>, transform_indices = @transform_13, window_bounds = array<i64: 1, 32>}, {pipeline_mode = #tpu.pipeline_mode<synchronous>, transform_indices = @transform_14, window_bounds = array<i64: 1, 1>}, {pipeline_mode = #tpu.pipeline_mode<synchronous>, transform_indices = @transform_15, window_bounds = array<i64: 1, 32>}, {pipeline_mode = #tpu.pipeline_mode<synchronous>, transform_indices = @transform_16, window_bounds = array<i64: 1, 1>}, {transform_indices = @transform_17, window_bounds = array<i64: 8, 2>}]} {
    %c0_i32 = arith.constant 0 : i32
    %0 = arith.cmpi eq, %arg1, %c0_i32 : i32
    %1 = arith.extui %0 : i1 to i32
    %c0_i32_0 = arith.constant 0 : i32
    %2 = arith.cmpi ne, %1, %c0_i32_0 : i32
    scf.if %2 {
      %cst_10 = arith.constant 0.000000e+00 : f32
      %12 = vector.broadcast %cst_10 : f32 to vector<8x128xf32>
      %c0_11 = arith.constant 0 : index
      %c0_12 = arith.constant 0 : index
      %13 = vector.load %arg20[%c0_11, %c0_12] : memref<8x128xf32, #tpu.memory_space<vmem>>, vector<8x128xf32>
      tpu.vector_store %arg20[%c0_11, %c0_12], %12 {strides = array<i32>} : memref<8x128xf32, #tpu.memory_space<vmem>>, vector<8x128xf32>,
    } else {
    }
    %c0 = arith.constant 0 : index
    %c0_1 = arith.constant 0 : index
    %3 = vector.load %arg2[%c0, %c0_1] : memref<8x64xf32, #tpu.memory_space<vmem>>, vector<8x64xf32>
    %c0_2 = arith.constant 0 : index
    %c0_3 = arith.constant 0 : index
    %4 = vector.load %arg20[%c0_2, %c0_3] : memref<8x128xf32, #tpu.memory_space<vmem>>, vector<8x128xf32>
    %c0_4 = arith.constant 0 : index
    %c0_5 = arith.constant 0 : index
    %5 = vector.load %arg4[%c0_4, %c0_5] : memref<64x128xf32, #tpu.memory_space<vmem>>, vector<64x128xf32>
    %cst = arith.constant dense<0.000000e+00> : vector<8x128xf32>
    %6 = tpu.matmul %3, %5, %cst {dimension_numbers = #tpu.dot_dimension_numbers<[1], [0], [0], [1], [0, 0, 1, 1], [], []>} : vector<8x64xf32>, vector<64x128xf32>, vector<8x128xf32> -> vector<8x128xf32>
    %7 = arith.addf %4, %6 : vector<8x128xf32>
    %c0_6 = arith.constant 0 : index
    %c0_7 = arith.constant 0 : index
    %8 = vector.load %arg20[%c0_6, %c0_7] : memref<8x128xf32, #tpu.memory_space<vmem>>, vector<8x128xf32>
    tpu.vector_store %arg20[%c0_6, %c0_7], %7 {strides = array<i32>} : memref<8x128xf32, #tpu.memory_space<vmem>>, vector<8x128xf32>,
    %c0_i32_8 = arith.constant 0 : i32
    %9 = arith.cmpi eq, %arg1, %c0_i32_8 : i32
    %10 = arith.extui %9 : i1 to i32
    %c0_i32_9 = arith.constant 0 : i32
    %11 = arith.cmpi ne, %10, %c0_i32_9 : i32
    scf.if %11 {
      %c0_10 = arith.constant 0 : index
      %c0_11 = arith.constant 0 : index
      %12 = vector.load %arg20[%c0_10, %c0_11] : memref<8x128xf32, #tpu.memory_space<vmem>>, vector<8x128xf32>
      %c0_12 = arith.constant 0 : index
      %c0_13 = arith.constant 0 : index
      %13 = vector.load %arg5[%c0_12, %c0_13] : memref<1x128xf32, #tpu.memory_space<vmem>>, vector<1x128xf32>
      %14 = vector.broadcast %13 : vector<1x128xf32> to vector<8x128xf32>
      %15 = arith.addf %12, %14 : vector<8x128xf32>
      %cst_14 = arith.constant dense<0.000000e+00> : vector<8xf32>
      %16 = vector.multi_reduction <add>, %15, %cst_14 [1] : vector<8x128xf32> to vector<8xf32>
      %17 = vector.shape_cast %16 : vector<8xf32> to vector<8x1xf32>
      %cst_15 = arith.constant 3.125000e-02 : f32
      %18 = vector.broadcast %cst_15 : f32 to vector<8x1xf32>
      %19 = arith.mulf %17, %18 : vector<8x1xf32>
      %20 = vector.broadcast %19 : vector<8x1xf32> to vector<8x128xf32>
      %21 = arith.subf %15, %20 : vector<8x128xf32>
      %22 = tpu.iota {dimensions = array<i32: 1>} : vector<8x128xi32>
      %c32_i32 = arith.constant 32 : i32
      %23 = vector.broadcast %c32_i32 : i32 to vector<8x128xi32>
      %24 = arith.cmpi slt, %22, %23 : vector<8x128xi32>
      %cst_16 = arith.constant 0.000000e+00 : f32
      %25 = vector.broadcast %cst_16 : f32 to vector<8x128xf32>
      %26 = arith.select %24, %21, %25 : vector<8x128xi1>, vector<8x128xf32>
      %27 = arith.mulf %26, %26 : vector<8x128xf32>
      %cst_17 = arith.constant dense<0.000000e+00> : vector<8xf32>
      %28 = vector.multi_reduction <add>, %27, %cst_17 [1] : vector<8x128xf32> to vector<8xf32>
      %29 = vector.shape_cast %28 : vector<8xf32> to vector<8x1xf32>
      %cst_18 = arith.constant 3.125000e-02 : f32
      %30 = vector.broadcast %cst_18 : f32 to vector<8x1xf32>
      %31 = arith.mulf %29, %30 : vector<8x1xf32>
      %cst_19 = arith.constant 9.99999974E-6 : f32
      %32 = vector.broadcast %cst_19 : f32 to vector<8x1xf32>
      %33 = arith.addf %31, %32 : vector<8x1xf32>
      %34 = math.rsqrt %33 : vector<8x1xf32>
      %35 = vector.broadcast %34 : vector<8x1xf32> to vector<8x128xf32>
      %36 = arith.mulf %26, %35 : vector<8x128xf32>
      %c0_20 = arith.constant 0 : index
      %c0_21 = arith.constant 0 : index
      %37 = vector.load %arg6[%c0_20, %c0_21] : memref<1x128xf32, #tpu.memory_space<vmem>>, vector<1x128xf32>
      %38 = vector.broadcast %37 : vector<1x128xf32> to vector<8x128xf32>
      %39 = arith.mulf %36, %38 : vector<8x128xf32>
      %c0_22 = arith.constant 0 : index
      %c0_23 = arith.constant 0 : index
      %40 = vector.load %arg7[%c0_22, %c0_23] : memref<1x128xf32, #tpu.memory_space<vmem>>, vector<1x128xf32>
      %41 = vector.broadcast %40 : vector<1x128xf32> to vector<8x128xf32>
      %42 = arith.addf %39, %41 : vector<8x128xf32>
      %43 = math.tanh %42 : vector<8x128xf32>
      %c0_24 = arith.constant 0 : index
      %c0_25 = arith.constant 0 : index
      %44 = vector.load %arg3[%c0_24, %c0_25] : memref<8x4xf32, #tpu.memory_space<vmem>>, vector<8x4xf32>
      %c0_26 = arith.constant 0 : index
      %c0_27 = arith.constant 0 : index
      %45 = vector.load %arg8[%c0_26, %c0_27] : memref<128x64xf32, #tpu.memory_space<vmem>>, vector<128x64xf32>
      %cst_28 = arith.constant dense<0.000000e+00> : vector<8x64xf32>
      %46 = tpu.matmul %43, %45, %cst_28 {dimension_numbers = #tpu.dot_dimension_numbers<[1], [0], [0], [1], [0, 0, 1, 1], [], []>} : vector<8x128xf32>, vector<128x64xf32>, vector<8x64xf32> -> vector<8x64xf32>
      %c0_29 = arith.constant 0 : index
      %c0_30 = arith.constant 0 : index
      %47 = vector.load %arg9[%c0_29, %c0_30] : memref<4x64xf32, #tpu.memory_space<vmem>>, vector<4x64xf32>
      %cst_31 = arith.constant dense<0.000000e+00> : vector<8x64xf32>
      %48 = tpu.matmul %44, %47, %cst_31 {dimension_numbers = #tpu.dot_dimension_numbers<[1], [0], [0], [1], [0, 0, 1, 1], [], []>} : vector<8x4xf32>, vector<4x64xf32>, vector<8x64xf32> -> vector<8x64xf32>
      %49 = arith.addf %46, %48 : vector<8x64xf32>
      %c0_32 = arith.constant 0 : index
      %c0_33 = arith.constant 0 : index
      %50 = vector.load %arg10[%c0_32, %c0_33] : memref<1x64xf32, #tpu.memory_space<vmem>>, vector<1x64xf32>
      %51 = vector.broadcast %50 : vector<1x64xf32> to vector<8x64xf32>
      %52 = arith.addf %49, %51 : vector<8x64xf32>
      %cst_34 = arith.constant 0.000000e+00 : f32
      %53 = vector.broadcast %cst_34 : f32 to vector<8x64xf32>
      %54 = arith.maximumf %52, %53 : vector<8x64xf32>
      %55 = vector.extract_strided_slice %54 {offsets = [0, 0], sizes = [8, 32], strides = [1, 1]} : vector<8x64xf32> to vector<8x32xf32>
      %56 = vector.extract_strided_slice %54 {offsets = [0, 32], sizes = [8, 32], strides = [1, 1]} : vector<8x64xf32> to vector<8x32xf32>
      %c0_35 = arith.constant 0 : index
      %c0_36 = arith.constant 0 : index
      %57 = vector.load %arg11[%c0_35, %c0_36] : memref<32x32xf32, #tpu.memory_space<vmem>>, vector<32x32xf32>
      %cst_37 = arith.constant dense<0.000000e+00> : vector<8x32xf32>
      %58 = tpu.matmul %55, %57, %cst_37 {dimension_numbers = #tpu.dot_dimension_numbers<[1], [0], [0], [1], [0, 0, 1, 1], [], []>} : vector<8x32xf32>, vector<32x32xf32>, vector<8x32xf32> -> vector<8x32xf32>
      %c0_38 = arith.constant 0 : index
      %c0_39 = arith.constant 0 : index
      %59 = vector.load %arg12[%c0_38, %c0_39] : memref<1x32xf32, #tpu.memory_space<vmem>>, vector<1x32xf32>
      %60 = vector.broadcast %59 : vector<1x32xf32> to vector<8x32xf32>
      %61 = arith.addf %58, %60 : vector<8x32xf32>
      %cst_40 = arith.constant 0.000000e+00 : f32
      %62 = vector.broadcast %cst_40 : f32 to vector<8x32xf32>
      %63 = arith.maximumf %61, %62 : vector<8x32xf32>
      %c0_41 = arith.constant 0 : index
      %c0_42 = arith.constant 0 : index
      %64 = vector.load %arg15[%c0_41, %c0_42] : memref<1x32xf32, #tpu.memory_space<vmem>>, vector<1x32xf32>
      %65 = vector.broadcast %64 : vector<1x32xf32> to vector<8x32xf32>
      %66 = arith.mulf %63, %65 : vector<8x32xf32>
      %cst_43 = arith.constant dense<0.000000e+00> : vector<8xf32>
      %67 = vector.multi_reduction <add>, %66, %cst_43 [1] : vector<8x32xf32> to vector<8xf32>
      %68 = vector.shape_cast %67 : vector<8xf32> to vector<8x1xf32>
      %c0_44 = arith.constant 0 : index
      %c0_45 = arith.constant 0 : index
      %69 = vector.load %arg16[%c0_44, %c0_45] : memref<1x1xf32, #tpu.memory_space<vmem>>, vector<1x1xf32>
      %70 = vector.broadcast %69 : vector<1x1xf32> to vector<8x1xf32>
      %71 = arith.addf %68, %70 : vector<8x1xf32>
      %c0_46 = arith.constant 0 : index
      %c0_47 = arith.constant 0 : index
      %72 = vector.load %arg13[%c0_46, %c0_47] : memref<32x32xf32, #tpu.memory_space<vmem>>, vector<32x32xf32>
      %cst_48 = arith.constant dense<0.000000e+00> : vector<8x32xf32>
      %73 = tpu.matmul %56, %72, %cst_48 {dimension_numbers = #tpu.dot_dimension_numbers<[1], [0], [0], [1], [0, 0, 1, 1], [], []>} : vector<8x32xf32>, vector<32x32xf32>, vector<8x32xf32> -> vector<8x32xf32>
      %c0_49 = arith.constant 0 : index
      %c0_50 = arith.constant 0 : index
      %74 = vector.load %arg14[%c0_49, %c0_50] : memref<1x32xf32, #tpu.memory_space<vmem>>, vector<1x32xf32>
      %75 = vector.broadcast %74 : vector<1x32xf32> to vector<8x32xf32>
      %76 = arith.addf %73, %75 : vector<8x32xf32>
      %cst_51 = arith.constant 0.000000e+00 : f32
      %77 = vector.broadcast %cst_51 : f32 to vector<8x32xf32>
      %78 = arith.maximumf %76, %77 : vector<8x32xf32>
      %c0_52 = arith.constant 0 : index
      %c0_53 = arith.constant 0 : index
      %79 = vector.load %arg17[%c0_52, %c0_53] : memref<1x32xf32, #tpu.memory_space<vmem>>, vector<1x32xf32>
      %80 = vector.broadcast %79 : vector<1x32xf32> to vector<8x32xf32>
      %81 = arith.mulf %78, %80 : vector<8x32xf32>
      %cst_54 = arith.constant dense<0.000000e+00> : vector<8xf32>
      %82 = vector.multi_reduction <add>, %81, %cst_54 [1] : vector<8x32xf32> to vector<8xf32>
      %83 = vector.shape_cast %82 : vector<8xf32> to vector<8x1xf32>
      %c0_55 = arith.constant 0 : index
      %c0_56 = arith.constant 0 : index
      %84 = vector.load %arg18[%c0_55, %c0_56] : memref<1x1xf32, #tpu.memory_space<vmem>>, vector<1x1xf32>
      %85 = vector.broadcast %84 : vector<1x1xf32> to vector<8x1xf32>
      %86 = arith.addf %83, %85 : vector<8x1xf32>
      %87 = tpu.concatenate %71, %86 in 1 : vector<8x1xf32>, vector<8x1xf32> -> vector<8x2xf32>
      %c0_57 = arith.constant 0 : index
      %c0_58 = arith.constant 0 : index
      %88 = vector.load %arg19[%c0_57, %c0_58] : memref<8x2xf32, #tpu.memory_space<vmem>>, vector<8x2xf32>
      tpu.vector_store %arg19[%c0_57, %c0_58], %87 {strides = array<i32>} : memref<8x2xf32, #tpu.memory_space<vmem>>, vector<8x2xf32>,
    } else {
    }
    return
  }
  func.func @transform_0(%arg0: i32, %arg1: i32) -> (i32, i32) {
    %c0_i32 = arith.constant 0 : i32
    return %arg0, %arg1 : i32, i32
  }
  func.func @transform_1(%arg0: i32, %arg1: i32) -> (i32, i32) {
    %c0_i32 = arith.constant 0 : i32
    %c0_i32_0 = arith.constant 0 : i32
    return %arg0, %c0_i32 : i32, i32
  }
  func.func @transform_2(%arg0: i32, %arg1: i32) -> (i32, i32) {
    %c0_i32 = arith.constant 0 : i32
    %c0_i32_0 = arith.constant 0 : i32
    return %arg1, %c0_i32 : i32, i32
  }
  func.func @transform_3(%arg0: i32, %arg1: i32) -> (i32, i32) {
    %c0_i32 = arith.constant 0 : i32
    %c0_i32_0 = arith.constant 0 : i32
    %c0_i32_1 = arith.constant 0 : i32
    return %c0_i32, %c0_i32_0 : i32, i32
  }
  func.func @transform_4(%arg0: i32, %arg1: i32) -> (i32, i32) {
    %c0_i32 = arith.constant 0 : i32
    %c0_i32_0 = arith.constant 0 : i32
    %c0_i32_1 = arith.constant 0 : i32
    return %c0_i32, %c0_i32_0 : i32, i32
  }
  func.func @transform_5(%arg0: i32, %arg1: i32) -> (i32, i32) {
    %c0_i32 = arith.constant 0 : i32
    %c0_i32_0 = arith.constant 0 : i32
    %c0_i32_1 = arith.constant 0 : i32
    return %c0_i32, %c0_i32_0 : i32, i32
  }
  func.func @transform_6(%arg0: i32, %arg1: i32) -> (i32, i32) {
    %c0_i32 = arith.constant 0 : i32
    %c0_i32_0 = arith.constant 0 : i32
    %c0_i32_1 = arith.constant 0 : i32
    return %c0_i32, %c0_i32_0 : i32, i32
  }
  func.func @transform_7(%arg0: i32, %arg1: i32) -> (i32, i32) {
    %c0_i32 = arith.constant 0 : i32
    %c0_i32_0 = arith.constant 0 : i32
    %c0_i32_1 = arith.constant 0 : i32
    return %c0_i32, %c0_i32_0 : i32, i32
  }
  func.func @transform_8(%arg0: i32, %arg1: i32) -> (i32, i32) {
    %c0_i32 = arith.constant 0 : i32
    %c0_i32_0 = arith.constant 0 : i32
    %c0_i32_1 = arith.constant 0 : i32
    return %c0_i32, %c0_i32_0 : i32, i32
  }
  func.func @transform_9(%arg0: i32, %arg1: i32) -> (i32, i32) {
    %c0_i32 = arith.constant 0 : i32
    %c0_i32_0 = arith.constant 0 : i32
    %c0_i32_1 = arith.constant 0 : i32
    return %c0_i32, %c0_i32_0 : i32, i32
  }
  func.func @transform_10(%arg0: i32, %arg1: i32) -> (i32, i32) {
    %c0_i32 = arith.constant 0 : i32
    %c0_i32_0 = arith.constant 0 : i32
    %c0_i32_1 = arith.constant 0 : i32
    return %c0_i32, %c0_i32_0 : i32, i32
  }
  func.func @transform_11(%arg0: i32, %arg1: i32) -> (i32, i32) {
    %c0_i32 = arith.constant 0 : i32
    %c0_i32_0 = arith.constant 0 : i32
    %c0_i32_1 = arith.constant 0 : i32
    return %c0_i32, %c0_i32_0 : i32, i32
  }
  func.func @transform_12(%arg0: i32, %arg1: i32) -> (i32, i32) {
    %c0_i32 = arith.constant 0 : i32
    %c0_i32_0 = arith.constant 0 : i32
    %c0_i32_1 = arith.constant 0 : i32
    return %c0_i32, %c0_i32_0 : i32, i32
  }
  func.func @transform_13(%arg0: i32, %arg1: i32) -> (i32, i32) {
    %c0_i32 = arith.constant 0 : i32
    %c0_i32_0 = arith.constant 0 : i32
    %c0_i32_1 = arith.constant 0 : i32
    return %c0_i32, %c0_i32_0 : i32, i32
  }
  func.func @transform_14(%arg0: i32, %arg1: i32) -> (i32, i32) {
    %c0_i32 = arith.constant 0 : i32
    %c0_i32_0 = arith.constant 0 : i32
    %c0_i32_1 = arith.constant 0 : i32
    return %c0_i32, %c0_i32_0 : i32, i32
  }
  func.func @transform_15(%arg0: i32, %arg1: i32) -> (i32, i32) {
    %c0_i32 = arith.constant 0 : i32
    %c0_i32_0 = arith.constant 0 : i32
    %c0_i32_1 = arith.constant 0 : i32
    return %c0_i32, %c0_i32_0 : i32, i32
  }
  func.func @transform_16(%arg0: i32, %arg1: i32) -> (i32, i32) {
    %c0_i32 = arith.constant 0 : i32
    %c0_i32_0 = arith.constant 0 : i32
    %c0_i32_1 = arith.constant 0 : i32
    return %c0_i32, %c0_i32_0 : i32, i32
  }
  func.func @transform_17(%arg0: i32, %arg1: i32) -> (i32, i32) {
    %c0_i32 = arith.constant 0 : i32
    %c0_i32_0 = arith.constant 0 : i32
    return %arg0, %c0_i32 : i32, i32
  }
}

</mosaic_0001>

<llo_original>
// kernel: critic_forward.1
$region0: #{critic_forward.1}
  #allocation0 [shape = 'u32[]', space=smem, size = 0x4, offset = 0x4, fixed_abs, tag = 'smem constant byte address 0x4 - core index']
  #allocation1 [shape = 'u32[144,128]{1,0:T(1,128)}', space=vmem, size = 0x12000, scoped, tag = 'internal scratch']
  #allocation2 [shape = 'f32[8,128]{1,0:T(8,128)}', space=vmem, size = 0x1000, scoped, tag = 'scratch operand']
  #allocation3 [shape = 'f32[1,1]{1,0:T(1,128)S(1)}', space=vmem, size = 0x200, scoped, tag = 'scoped memory for critic_forward.1']
  #allocation4 [shape = 'f32[1,1]{1,0:T(1,128)S(1)}', space=vmem, size = 0x200, scoped, tag = 'scoped memory for critic_forward.1']
  %s0 = inlined_call_operand.vmem [shape: f32[8,64], index: 0, kind: input, shape index: {}]
  %s1 = inlined_call_operand.vmem [shape: f32[8,4], index: 1, kind: input, shape index: {}]
  %s2 = inlined_call_operand.vmem [shape: f32[64,128], index: 2, kind: input, shape index: {}]
  %s3 = inlined_call_operand.vmem [shape: f32[1,128], index: 3, kind: input, shape index: {}]
  %s4 = inlined_call_operand.vmem [shape: f32[1,128], index: 4, kind: input, shape index: {}]
  %s5 = inlined_call_operand.vmem [shape: f32[1,128], index: 5, kind: input, shape index: {}]
  %s6 = inlined_call_operand.vmem [shape: f32[128,64], index: 6, kind: input, shape index: {}]
  %s7 = inlined_call_operand.vmem [shape: f32[4,64], index: 7, kind: input, shape index: {}]
  %s8 = inlined_call_operand.vmem [shape: f32[1,64], index: 8, kind: input, shape index: {}]
  %s9 = inlined_call_operand.vmem [shape: f32[32,32], index: 9, kind: input, shape index: {}]
  %s10 = inlined_call_operand.vmem [shape: f32[1,32], index: 10, kind: input, shape index: {}]
  %s11 = inlined_call_operand.vmem [shape: f32[32,32], index: 11, kind: input, shape index: {}]
  %s12 = inlined_call_operand.vmem [shape: f32[1,32], index: 12, kind: input, shape index: {}]
  %s13 = inlined_call_operand.vmem [shape: f32[1,32], index: 13, kind: input, shape index: {}]
  %s14 = inlined_call_operand.<no memory space> [shape: f32[1,1], index: 14, kind: input, shape index: {}]
  %s15 = inlined_call_operand.vmem [shape: f32[1,32], index: 15, kind: input, shape index: {}]
  %s16 = inlined_call_operand.<no memory space> [shape: f32[1,1], index: 16, kind: input, shape index: {}]
  %s17 = inlined_call_operand.vmem [shape: f32[8,2], index: 17, kind: output, shape index: {}]
  %s18 = sld [smem:[#allocation0]]
  $region86: #{critic_forward.1} parent=0
    _
  %s20 = ssub.s32 1, %s18
  %s21 = scalar_select 0, %s20, %s18
  %v22 = vstv %s14
  %23 = vst [vmem:[#allocation3] sm:$0x1] %v22
  %v24 = vstv %s16
  %25 = vst [vmem:[#allocation4] sm:$0x1] %v24
  // Predicated region
  $region2: #{critic_forward.1} parent=0 // pred_check
    _
  $region3: #{critic_forward.1} parent=0 // pred_check_branch
    %27 = sbr.rel (0) target = $region5
  $region4: #{critic_forward.1} parent=0 // pred_region
    _
  $region5: #{critic_forward.1} parent=0 // pred_fallthru
    _
  // Predicated region
  $region6: #{critic_forward.1} parent=0 // pred_check
    _
  $region7: #{critic_forward.1} parent=0 // pred_check_branch
    %29 = sbr.rel (0) target = $region9
  $region8: #{critic_forward.1} parent=0 // pred_region
    _
  $region9: #{critic_forward.1} parent=0 // pred_fallthru
    _
  // Predicated region
  $region10: #{critic_forward.1} parent=0 // pred_check
    _
  $region11: #{critic_forward.1} parent=0 // pred_check_branch
    %31 = sbr.rel (0) target = $region13
  $region12: #{critic_forward.1} parent=0 // pred_region
    _
  $region13: #{critic_forward.1} parent=0 // pred_fallthru
    _
  // Predicated region
  $region14: #{critic_forward.1} parent=0 // pred_check
    _
  $region15: #{critic_forward.1} parent=0 // pred_check_branch
    %33 = sbr.rel (0) target = $region17
  $region16: #{critic_forward.1} parent=0 // pred_region
    _
  $region17: #{critic_forward.1} parent=0 // pred_fallthru
    _
  // Predicated region
  $region18: #{critic_forward.1} parent=0 // pred_check
    _
  $region19: #{critic_forward.1} parent=0 // pred_check_branch
    %35 = sbr.rel (0) target = $region21
  $region20: #{critic_forward.1} parent=0 // pred_region
    _
  $region21: #{critic_forward.1} parent=0 // pred_fallthru
    _
  // Predicated region
  $region22: #{critic_forward.1} parent=0 // pred_check
    _
  $region23: #{critic_forward.1} parent=0 // pred_check_branch
    %37 = sbr.rel (0) target = $region25
  $region24: #{critic_forward.1} parent=0 // pred_region
    _
  $region25: #{critic_forward.1} parent=0 // pred_fallthru
    _
  // Predicated region
  $region26: #{critic_forward.1} parent=0 // pred_check
    _
  $region27: #{critic_forward.1} parent=0 // pred_check_branch
    %39 = sbr.rel (0) target = $region29
  $region28: #{critic_forward.1} parent=0 // pred_region
    _
  $region29: #{critic_forward.1} parent=0 // pred_fallthru
    _
  // Predicated region
  $region30: #{critic_forward.1} parent=0 // pred_check
    _
  $region31: #{critic_forward.1} parent=0 // pred_check_branch
    %41 = sbr.rel (0) target = $region33
  $region32: #{critic_forward.1} parent=0 // pred_region
    _
  $region33: #{critic_forward.1} parent=0 // pred_fallthru
    _
  // Predicated region
  $region34: #{critic_forward.1} parent=0 // pred_check
    _
  $region35: #{critic_forward.1} parent=0 // pred_check_branch
    %43 = sbr.rel (0) target = $region37
  $region36: #{critic_forward.1} parent=0 // pred_region
    _
  $region37: #{critic_forward.1} parent=0 // pred_fallthru
    _
  // Predicated region
  $region38: #{critic_forward.1} parent=0 // pred_check
    _
  $region39: #{critic_forward.1} parent=0 // pred_check_branch
    %45 = sbr.rel (0) target = $region41
  $region40: #{critic_forward.1} parent=0 // pred_region
    _
  $region41: #{critic_forward.1} parent=0 // pred_fallthru
    _
  // Predicated region
  $region42: #{critic_forward.1} parent=0 // pred_check
    _
  $region43: #{critic_forward.1} parent=0 // pred_check_branch
    %47 = sbr.rel (0) target = $region45
  $region44: #{critic_forward.1} parent=0 // pred_region
    _
  $region45: #{critic_forward.1} parent=0 // pred_fallthru
    _
  // Predicated region
  $region46: #{critic_forward.1} parent=0 // pred_check
    _
  $region47: #{critic_forward.1} parent=0 // pred_check_branch
    %49 = sbr.rel (0) target = $region49
  $region48: #{critic_forward.1} parent=0 // pred_region
    _
  $region49: #{critic_forward.1} parent=0 // pred_fallthru
    _
  // Predicated region
  $region50: #{critic_forward.1} parent=0 // pred_check
    _
  $region51: #{critic_forward.1} parent=0 // pred_check_branch
    %51 = sbr.rel (0) target = $region53
  $region52: #{critic_forward.1} parent=0 // pred_region
    _
  $region53: #{critic_forward.1} parent=0 // pred_fallthru
    _
  // Predicated region
  $region54: #{critic_forward.1} parent=0 // pred_check
    _
  $region55: #{critic_forward.1} parent=0 // pred_check_branch
    %53 = sbr.rel (0) target = $region57
  $region56: #{critic_forward.1} parent=0 // pred_region
    _
  $region57: #{critic_forward.1} parent=0 // pred_fallthru
    _
  // Predicated region
  $region58: #{critic_forward.1} parent=0 // pred_check
    _
  $region59: #{critic_forward.1} parent=0 // pred_check_branch
    %55 = sbr.rel (0) target = $region61
  $region60: #{critic_forward.1} parent=0 // pred_region
    _
  $region61: #{critic_forward.1} parent=0 // pred_fallthru
    _
  // Predicated region
  $region62: #{critic_forward.1} parent=0 // pred_check
    _
  $region63: #{critic_forward.1} parent=0 // pred_check_branch
    %57 = sbr.rel (0) target = $region65
  $region64: #{critic_forward.1} parent=0 // pred_region
    _
  $region65: #{critic_forward.1} parent=0 // pred_fallthru
    _
  // Predicated region
  $region66: #{critic_forward.1} parent=0 // pred_check
    _
  $region67: #{critic_forward.1} parent=0 // pred_check_branch
    %59 = sbr.rel (0) target = $region69
  $region68: #{critic_forward.1} parent=0 // pred_region
    _
  $region69: #{critic_forward.1} parent=0 // pred_fallthru
    _
  %p60 = scmp.eq.s32.totalorder 0, 0
  // Predicated region
  $region70: #{critic_forward.1} parent=0 // pred_check
    %p61 = pneg %p60
  $region71: #{critic_forward.1} parent=0 // pred_check_branch
    %63 = sbr.rel (%p61) target = $region73
  $region72: #{critic_forward.1} parent=0 // pred_region
    %64 = vst [vmem:[#allocation2] sm:$0xff] 0.0
  $region73: #{critic_forward.1} parent=0 // pred_fallthru
    _
  %v65 = vld [vmem:[%s0] sm:$0xff]
  %v66 = vld [vmem:[#allocation2] sm:$0xff]
  %v67 = vld [vmem:[%s2] sm:$0xff]
  %v68 = vld [vmem:[%s2 + $0x8] sm:$0xff]
  %v69 = vld [vmem:[%s2 + $0x10] sm:$0xff]
  %v70 = vld [vmem:[%s2 + $0x18] sm:$0xff]
  %v71 = vld [vmem:[%s2 + $0x20] sm:$0xff]
  %v72 = vld [vmem:[%s2 + $0x28] sm:$0xff]
  %v73 = vld [vmem:[%s2 + $0x30] sm:$0xff]
  %v74 = vld [vmem:[%s2 + $0x38] sm:$0xff]
  %vm75 = vcmask 523264
  %v77 = vsel %vm75, %v65, 0
  %79 = vmatprep.subr.mxu0 0.0
  %80 = vmatpush1.msra.mxu0 %v67
  %81 = vmatprep.subr.mxu0 0.0
  %82 = vmatpush1.msra.mxu0 %v68
  %83 = vmatprep.subr.mxu0 0.0
  %84 = vmatpush1.msra.mxu0 %v69
  %85 = vmatprep.subr.mxu0 0.0
  %86 = vmatpush1.msra.mxu0 %v70
  %87 = vmatprep.subr.mxu0 0.0
  %88 = vmatpush1.msra.mxu0 %v71
  %89 = vmatprep.subr.mxu0 0.0
  %90 = vmatpush1.msra.mxu0 %v72
  %91 = vmatprep.subr.mxu0 0.0
  %92 = vmatpush1.msra.mxu0 %v73
  %93 = vmatprep.subr.mxu0 0.0
  %94 = vmatpush1.msra.mxu0 %v74
  %95 = vmatprep.subr.mxu0 0.0
  %96 = vmatpush1.msra.mxu0 0.0
  %97 = vmatprep.subr.mxu0 0.0
  %98 = vmatpush1.msra.mxu0 0.0
  %99 = vmatprep.subr.mxu0 0.0
  %100 = vmatpush1.msra.mxu0 0.0
  %101 = vmatprep.subr.mxu0 0.0
  %102 = vmatpush1.msra.mxu0 0.0
  %103 = vmatprep.subr.mxu0 0.0
  %104 = vmatpush1.msra.mxu0 0.0
  %105 = vmatprep.subr.mxu0 0.0
  %106 = vmatpush1.msra.mxu0 0.0
  %107 = vmatprep.subr.mxu0 0.0
  %108 = vmatpush1.msra.mxu0 0.0
  %109 = vmatprep.subr.mxu0 0.0
  %110 = vmatpush1.msra.mxu0 0.0
  %111 = vmatprep.subr.mxu0 0.0
  %112 = vmatpush1.msra.mxu0 0.0
  %113 = vmatprep.subr.mxu0 0.0
  %114 = vmatpush1.msra.mxu0 0.0
  %115 = vmatprep.subr.mxu0 0.0
  %116 = vmatpush1.msra.mxu0 0.0
  %117 = vmatprep.subr.mxu0 0.0
  %118 = vmatpush1.msra.mxu0 0.0
  %119 = vmatprep.subr.mxu0 0.0
  %120 = vmatpush1.msra.mxu0 0.0
  %121 = vmatprep.subr.mxu0 0.0
  %122 = vmatpush1.msra.mxu0 0.0
  %123 = vmatprep.subr.mxu0 0.0
  %124 = vmatpush1.msra.mxu0 0.0
  %125 = vmatprep.subr.mxu0 0.0
  %126 = vmatpush1.msra.mxu0 0.0
  %127 = vmatprep.subr.mxu0 0.0
  %128 = vmatpush1.msra.mxu0 0.0
  %129 = vmatprep.subr.mxu0 0.0
  %130 = vmatpush1.msra.mxu0 0.0
  %131 = vmatprep.subr.mxu0 0.0
  %132 = vmatpush1.msra.mxu0 0.0
  %133 = vmatprep.subr.mxu0 0.0
  %134 = vmatpush1.msra.mxu0 0.0
  %135 = vmatprep.subr.mxu0 0.0
  %136 = vmatpush1.msra.mxu0 0.0
  %137 = vmatprep.subr.mxu0 0.0
  %138 = vmatpush1.msra.mxu0 0.0
  %139 = vmatprep.subr.mxu0 0.0
  %140 = vmatpush1.msra.mxu0 0.0
  %141 = vmatprep.subr.mxu0 0.0
  %142 = vmatpush1.msra.mxu0 0.0
  %143 = vmatprep.mubr.f32.mxu0 0.0
  %144 = vmatmul.mubr.f32.gmra.mrb[0].mxu0 %v77
  %v145 = vpop.f32.mrb[0].mxu0
  %v146 = vadd.f32 0.0, %v145
  %v147 = vpop.f32.mrb[0].mxu0
  %148 = vdwg.mxu0
  %v149 = vadd.f32 %v66, %v146
  %150 = vst [vmem:[#allocation2] sm:$0xff] %v149
  // Predicated region
  $region74: #{critic_forward.1} parent=0 // pred_check
    %p151 = pneg %p60
  $region75: #{critic_forward.1} parent=0 // pred_check_branch
    %153 = sbr.rel (%p151) target = $region77
  $region76: #{critic_forward.1} parent=0 // pred_region
    %v154 = vld [vmem:[#allocation2] sm:$0xff]
    %v155 = vld [vmem:[%s3] sm:$0x1]
    %v157 = vlaneseq
    %v158 = vshrl.u32 %v157, 7
    %v159 = vsub.s32 0, %v158
    %v160 = vrot.slane %v155, %v159
    %v162 = vadd.f32 %v154, %v160
    %163 = vadd.xlane.f32.xlu0 %v162
    %v164 = vpop.xlane.xlu0 %163
    %v165 = vmul.f32 %v164, 0.03125
    %v166 = vsub.f32 %v162, %v165
    %v167 = vlaneseq
    %v168 = vand.u32 %v167, 127
    %vm169 = vcmp.lt.s32.totalorder %v168, 32
    %v170 = vsel %vm169, %v166, 0.0
    %v171 = vmul.f32 %v170, %v170
    %172 = vadd.xlane.f32.xlu0 %v171
    %v173 = vpop.xlane.xlu0 %172
    %v174 = vmul.f32 %v173, 0.03125
    %v175 = vadd.f32 %v174, 1e-05
    %v176 = vrsqrt.pop %v175
    %v177 = vmul.f32 %v170, %v176
    %v178 = vld [vmem:[%s4] sm:$0x1]
    %v180 = vlaneseq
    %v181 = vshrl.u32 %v180, 7
    %v182 = vsub.s32 0, %v181
    %v183 = vrot.slane %v178, %v182
    %v185 = vmul.f32 %v177, %v183
    %v186 = vld [vmem:[%s5] sm:$0x1]
    %v188 = vlaneseq
    %v189 = vshrl.u32 %v188, 7
    %v190 = vsub.s32 0, %v189
    %v191 = vrot.slane %v186, %v190
    %v193 = vadd.f32 %v185, %v191
    %v194 = vtanh.pop %v193
    %v195 = vld [vmem:[%s1] sm:$0xff]
    %v196 = vld [vmem:[%s6] sm:$0xff]
    %v197 = vld [vmem:[%s6 + $0x8] sm:$0xff]
    %v198 = vld [vmem:[%s6 + $0x10] sm:$0xff]
    %v199 = vld [vmem:[%s6 + $0x18] sm:$0xff]
    %v200 = vld [vmem:[%s6 + $0x20] sm:$0xff]
    %v201 = vld [vmem:[%s6 + $0x28] sm:$0xff]
    %v202 = vld [vmem:[%s6 + $0x30] sm:$0xff]
    %v203 = vld [vmem:[%s6 + $0x38] sm:$0xff]
    %v204 = vld [vmem:[%s6 + $0x40] sm:$0xff]
    %v205 = vld [vmem:[%s6 + $0x48] sm:$0xff]
    %v206 = vld [vmem:[%s6 + $0x50] sm:$0xff]
    %v207 = vld [vmem:[%s6 + $0x58] sm:$0xff]
    %v208 = vld [vmem:[%s6 + $0x60] sm:$0xff]
    %v209 = vld [vmem:[%s6 + $0x68] sm:$0xff]
    %v210 = vld [vmem:[%s6 + $0x70] sm:$0xff]
    %v211 = vld [vmem:[%s6 + $0x78] sm:$0xff]
    %v212 = vld [vmem:[%s7] sm:$0xf]
    %vm213 = vcmask 31744
    %v215 = vsel %vm213, %v195, 0
    %vm217 = vcmask 1043456
    %v219 = vsel %vm217, %v212, 0
    %221 = vmatprep.subr.mxu0 0.0
    %222 = vmatpush1.msra.mxu0 %v219
    %223 = vmatprep.subr.mxu0 0.0
    %224 = vmatpush1.msra.mxu0 0.0
    %225 = vmatprep.subr.mxu0 0.0
    %226 = vmatpush1.msra.mxu0 0.0
    %227 = vmatprep.subr.mxu0 0.0
    %228 = vmatpush1.msra.mxu0 0.0
    %229 = vmatprep.subr.mxu0 0.0
    %230 = vmatpush1.msra.mxu0 0.0
    %231 = vmatprep.subr.mxu0 0.0
    %232 = vmatpush1.msra.mxu0 0.0
    %233 = vmatprep.subr.mxu0 0.0
    %234 = vmatpush1.msra.mxu0 0.0
    %235 = vmatprep.subr.mxu0 0.0
    %236 = vmatpush1.msra.mxu0 0.0
    %237 = vmatprep.subr.mxu0 0.0
    %238 = vmatpush1.msra.mxu0 0.0
    %239 = vmatprep.subr.mxu0 0.0
    %240 = vmatpush1.msra.mxu0 0.0
    %241 = vmatprep.subr.mxu0 0.0
    %242 = vmatpush1.msra.mxu0 0.0
    %243 = vmatprep.subr.mxu0 0.0
    %244 = vmatpush1.msra.mxu0 0.0
    %245 = vmatprep.subr.mxu0 0.0
    %246 = vmatpush1.msra.mxu0 0.0
    %247 = vmatprep.subr.mxu0 0.0
    %248 = vmatpush1.msra.mxu0 0.0
    %249 = vmatprep.subr.mxu0 0.0
    %250 = vmatpush1.msra.mxu0 0.0
    %251 = vmatprep.subr.mxu0 0.0
    %252 = vmatpush1.msra.mxu0 0.0
    %253 = vmatprep.subr.mxu0 0.0
    %254 = vmatpush1.msra.mxu0 0.0
    %255 = vmatprep.subr.mxu0 0.0
    %256 = vmatpush1.msra.mxu0 0.0
    %257 = vmatprep.subr.mxu0 0.0
    %258 = vmatpush1.msra.mxu0 0.0
    %259 = vmatprep.subr.mxu0 0.0
    %260 = vmatpush1.msra.mxu0 0.0
    %261 = vmatprep.subr.mxu0 0.0
    %262 = vmatpush1.msra.mxu0 0.0
    %263 = vmatprep.subr.mxu0 0.0
    %264 = vmatpush1.msra.mxu0 0.0
    %265 = vmatprep.subr.mxu0 0.0
    %266 = vmatpush1.msra.mxu0 0.0
    %267 = vmatprep.subr.mxu0 0.0
    %268 = vmatpush1.msra.mxu0 0.0
    %269 = vmatprep.subr.mxu0 0.0
    %270 = vmatpush1.msra.mxu0 0.0
    %271 = vmatprep.subr.mxu0 0.0
    %272 = vmatpush1.msra.mxu0 0.0
    %273 = vmatprep.subr.mxu0 0.0
    %274 = vmatpush1.msra.mxu0 0.0
    %275 = vmatprep.subr.mxu0 0.0
    %276 = vmatpush1.msra.mxu0 0.0
    %277 = vmatprep.subr.mxu0 0.0
    %278 = vmatpush1.msra.mxu0 0.0
    %279 = vmatprep.subr.mxu0 0.0
    %280 = vmatpush1.msra.mxu0 0.0
    %281 = vmatprep.subr.mxu0 0.0
    %282 = vmatpush1.msra.mxu0 0.0
    %283 = vmatprep.subr.mxu0 0.0
    %284 = vmatpush1.msra.mxu0 0.0
    %285 = vmatprep.mubr.f32.mxu0 0.0
    %286 = vmatmul.mubr.f32.gmra.mrb[0].mxu0 %v215
    %v287 = vpop.f32.mrb[0].mxu0
    %v288 = vadd.f32 0.0, %v287
    %v289 = vpop.f32.mrb[0].mxu0
    %290 = vdwg.mxu0
    %291 = vmatprep.subr.mxu0 0.0
    %292 = vmatpush1.msra.mxu0 %v196
    %293 = vmatprep.subr.mxu0 0.0
    %294 = vmatpush1.msra.mxu0 %v197
    %295 = vmatprep.subr.mxu0 0.0
    %296 = vmatpush1.msra.mxu0 %v198
    %297 = vmatprep.subr.mxu0 0.0
    %298 = vmatpush1.msra.mxu0 %v199
    %299 = vmatprep.subr.mxu0 0.0
    %300 = vmatpush1.msra.mxu0 %v200
    %301 = vmatprep.subr.mxu0 0.0
    %302 = vmatpush1.msra.mxu0 %v201
    %303 = vmatprep.subr.mxu0 0.0
    %304 = vmatpush1.msra.mxu0 %v202
    %305 = vmatprep.subr.mxu0 0.0
    %306 = vmatpush1.msra.mxu0 %v203
    %307 = vmatprep.subr.mxu0 0.0
    %308 = vmatpush1.msra.mxu0 %v204
    %309 = vmatprep.subr.mxu0 0.0
    %310 = vmatpush1.msra.mxu0 %v205
    %311 = vmatprep.subr.mxu0 0.0
    %312 = vmatpush1.msra.mxu0 %v206
    %313 = vmatprep.subr.mxu0 0.0
    %314 = vmatpush1.msra.mxu0 %v207
    %315 = vmatprep.subr.mxu0 0.0
    %316 = vmatpush1.msra.mxu0 %v208
    %317 = vmatprep.subr.mxu0 0.0
    %318 = vmatpush1.msra.mxu0 %v209
    %319 = vmatprep.subr.mxu0 0.0
    %320 = vmatpush1.msra.mxu0 %v210
    %321 = vmatprep.subr.mxu0 0.0
    %322 = vmatpush1.msra.mxu0 %v211
    %323 = vmatprep.subr.mxu0 0.0
    %324 = vmatpush1.msra.mxu0 0.0
    %325 = vmatprep.subr.mxu0 0.0
    %326 = vmatpush1.msra.mxu0 0.0
    %327 = vmatprep.subr.mxu0 0.0
    %328 = vmatpush1.msra.mxu0 0.0
    %329 = vmatprep.subr.mxu0 0.0
    %330 = vmatpush1.msra.mxu0 0.0
    %331 = vmatprep.subr.mxu0 0.0
    %332 = vmatpush1.msra.mxu0 0.0
    %333 = vmatprep.subr.mxu0 0.0
    %334 = vmatpush1.msra.mxu0 0.0
    %335 = vmatprep.subr.mxu0 0.0
    %336 = vmatpush1.msra.mxu0 0.0
    %337 = vmatprep.subr.mxu0 0.0
    %338 = vmatpush1.msra.mxu0 0.0
    %339 = vmatprep.subr.mxu0 0.0
    %340 = vmatpush1.msra.mxu0 0.0
    %341 = vmatprep.subr.mxu0 0.0
    %342 = vmatpush1.msra.mxu0 0.0
    %343 = vmatprep.subr.mxu0 0.0
    %344 = vmatpush1.msra.mxu0 0.0
    %345 = vmatprep.subr.mxu0 0.0
    %346 = vmatpush1.msra.mxu0 0.0
    %347 = vmatprep.subr.mxu0 0.0
    %348 = vmatpush1.msra.mxu0 0.0
    %349 = vmatprep.subr.mxu0 0.0
    %350 = vmatpush1.msra.mxu0 0.0
    %351 = vmatprep.subr.mxu0 0.0
    %352 = vmatpush1.msra.mxu0 0.0
    %353 = vmatprep.subr.mxu0 0.0
    %354 = vmatpush1.msra.mxu0 0.0
    %355 = vmatprep.mubr.f32.mxu0 0.0
    %356 = vmatmul.mubr.f32.gmra.mrb[0].mxu0 %v194
    %v357 = vpop.f32.mrb[0].mxu0
    %v358 = vadd.f32 %v288, %v357
    %v359 = vpop.f32.mrb[0].mxu0
    %360 = vdwg.mxu0
    %v361 = vld [vmem:[%s8] sm:$0x1]
    %v363 = vlaneseq
    %v364 = vshrl.u32 %v363, 7
    %v365 = vsub.s32 0, %v364
    %v366 = vrot.slane %v361, %v365
    %v368 = vadd.f32 %v358, %v366
    %v369 = vmax.f32 %v368, 0.0
    %v370 = vld [vmem:[%s9] sm:$0xff]
    %v371 = vld [vmem:[%s9 + $0x8] sm:$0xff]
    %v372 = vld [vmem:[%s9 + $0x10] sm:$0xff]
    %v373 = vld [vmem:[%s9 + $0x18] sm:$0xff]
    %v374 = vld [vmem:[%s10] sm:$0x1]
    %v376 = vlaneseq
    %v377 = vshrl.u32 %v376, 7
    %v378 = vsub.s32 0, %v377
    %v379 = vrot.slane %v374, %v378
    %vm381 = vcmask 261120
    %v383 = vsel %vm381, %v369, 0
    %385 = vmatprep.subr.mxu0 0.0
    %386 = vmatpush1.msra.mxu0 %v370
    %387 = vmatprep.subr.mxu0 0.0
    %388 = vmatpush1.msra.mxu0 %v371
    %389 = vmatprep.subr.mxu0 0.0
    %390 = vmatpush1.msra.mxu0 %v372
    %391 = vmatprep.subr.mxu0 0.0
    %392 = vmatpush1.msra.mxu0 %v373
    %393 = vmatprep.subr.mxu0 0.0
    %394 = vmatpush1.msra.mxu0 0.0
    %395 = vmatprep.subr.mxu0 0.0
    %396 = vmatpush1.msra.mxu0 0.0
    %397 = vmatprep.subr.mxu0 0.0
    %398 = vmatpush1.msra.mxu0 0.0
    %399 = vmatprep.subr.mxu0 0.0
    %400 = vmatpush1.msra.mxu0 0.0
    %401 = vmatprep.subr.mxu0 0.0
    %402 = vmatpush1.msra.mxu0 0.0
    %403 = vmatprep.subr.mxu0 0.0
    %404 = vmatpush1.msra.mxu0 0.0
    %405 = vmatprep.subr.mxu0 0.0
    %406 = vmatpush1.msra.mxu0 0.0
    %407 = vmatprep.subr.mxu0 0.0
    %408 = vmatpush1.msra.mxu0 0.0
    %409 = vmatprep.subr.mxu0 0.0
    %410 = vmatpush1.msra.mxu0 0.0
    %411 = vmatprep.subr.mxu0 0.0
    %412 = vmatpush1.msra.mxu0 0.0
    %413 = vmatprep.subr.mxu0 0.0
    %414 = vmatpush1.msra.mxu0 0.0
    %415 = vmatprep.subr.mxu0 0.0
    %416 = vmatpush1.msra.mxu0 0.0
    %417 = vmatprep.subr.mxu0 0.0
    %418 = vmatpush1.msra.mxu0 0.0
    %419 = vmatprep.subr.mxu0 0.0
    %420 = vmatpush1.msra.mxu0 0.0
    %421 = vmatprep.subr.mxu0 0.0
    %422 = vmatpush1.msra.mxu0 0.0
    %423 = vmatprep.subr.mxu0 0.0
    %424 = vmatpush1.msra.mxu0 0.0
    %425 = vmatprep.subr.mxu0 0.0
    %426 = vmatpush1.msra.mxu0 0.0
    %427 = vmatprep.subr.mxu0 0.0
    %428 = vmatpush1.msra.mxu0 0.0
    %429 = vmatprep.subr.mxu0 0.0
    %430 = vmatpush1.msra.mxu0 0.0
    %431 = vmatprep.subr.mxu0 0.0
    %432 = vmatpush1.msra.mxu0 0.0
    %433 = vmatprep.subr.mxu0 0.0
    %434 = vmatpush1.msra.mxu0 0.0
    %435 = vmatprep.subr.mxu0 0.0
    %436 = vmatpush1.msra.mxu0 0.0
    %437 = vmatprep.subr.mxu0 0.0
    %438 = vmatpush1.msra.mxu0 0.0
    %439 = vmatprep.subr.mxu0 0.0
    %440 = vmatpush1.msra.mxu0 0.0
    %441 = vmatprep.subr.mxu0 0.0
    %442 = vmatpush1.msra.mxu0 0.0
    %443 = vmatprep.subr.mxu0 0.0
    %444 = vmatpush1.msra.mxu0 0.0
    %445 = vmatprep.subr.mxu0 0.0
    %446 = vmatpush1.msra.mxu0 0.0
    %447 = vmatprep.subr.mxu0 0.0
    %448 = vmatpush1.msra.mxu0 0.0
    %449 = vmatprep.mubr.f32.mxu0 0.0
    %450 = vmatmul.mubr.f32.gmra.mrb[0].mxu0 %v383
    %v451 = vpop.f32.mrb[0].mxu0
    %v452 = vadd.f32 %v379, %v451
    %v453 = vpop.f32.mrb[0].mxu0
    %454 = vdwg.mxu0
    %v455 = vmax.f32 %v452, 0.0
    %v456 = vld [vmem:[%s13] sm:$0x1]
    %v458 = vlaneseq
    %v459 = vshrl.u32 %v458, 7
    %v460 = vsub.s32 0, %v459
    %v461 = vrot.slane %v456, %v460
    %v463 = vmul.f32 %v455, %v461
    %v464 = vsel %vm381, %v463, 0.0
    %465 = vadd.xlane.f32.xlu0 %v464
    %v466 = vpop.xlane.xlu0 %465
    %v467 = vld [vmem:[#allocation3] sm:$0x1]
    %v469 = vlaneseq
    %v470 = vshrl.u32 %v469, 7
    %v471 = vsub.s32 0, %v470
    %v472 = vrot.slane %v467, %v471
    %v474 = vadd.f32 %v466, %v472
    %v475 = vld [vmem:[%s11] sm:$0xff]
    %v476 = vld [vmem:[%s11 + $0x8] sm:$0xff]
    %v477 = vld [vmem:[%s11 + $0x10] sm:$0xff]
    %v478 = vld [vmem:[%s11 + $0x18] sm:$0xff]
    %v479 = vld [vmem:[%s12] sm:$0x1]
    %v481 = vlaneseq
    %v482 = vshrl.u32 %v481, 7
    %v483 = vsub.s32 0, %v482
    %v484 = vrot.slane %v479, %v483
    %486 = vrot.lane.b32.xlu0 %v369, 96
    %v487 = vpop.permute.xlu0 %486
    %v488 = vsel %vm381, %v487, 0
    %490 = vmatprep.subr.mxu0 0.0
    %491 = vmatpush1.msra.mxu0 %v475
    %492 = vmatprep.subr.mxu0 0.0
    %493 = vmatpush1.msra.mxu0 %v476
    %494 = vmatprep.subr.mxu0 0.0
    %495 = vmatpush1.msra.mxu0 %v477
    %496 = vmatprep.subr.mxu0 0.0
    %497 = vmatpush1.msra.mxu0 %v478
    %498 = vmatprep.subr.mxu0 0.0
    %499 = vmatpush1.msra.mxu0 0.0
    %500 = vmatprep.subr.mxu0 0.0
    %501 = vmatpush1.msra.mxu0 0.0
    %502 = vmatprep.subr.mxu0 0.0
    %503 = vmatpush1.msra.mxu0 0.0
    %504 = vmatprep.subr.mxu0 0.0
    %505 = vmatpush1.msra.mxu0 0.0
    %506 = vmatprep.subr.mxu0 0.0
    %507 = vmatpush1.msra.mxu0 0.0
    %508 = vmatprep.subr.mxu0 0.0
    %509 = vmatpush1.msra.mxu0 0.0
    %510 = vmatprep.subr.mxu0 0.0
    %511 = vmatpush1.msra.mxu0 0.0
    %512 = vmatprep.subr.mxu0 0.0
    %513 = vmatpush1.msra.mxu0 0.0
    %514 = vmatprep.subr.mxu0 0.0
    %515 = vmatpush1.msra.mxu0 0.0
    %516 = vmatprep.subr.mxu0 0.0
    %517 = vmatpush1.msra.mxu0 0.0
    %518 = vmatprep.subr.mxu0 0.0
    %519 = vmatpush1.msra.mxu0 0.0
    %520 = vmatprep.subr.mxu0 0.0
    %521 = vmatpush1.msra.mxu0 0.0
    %522 = vmatprep.subr.mxu0 0.0
    %523 = vmatpush1.msra.mxu0 0.0
    %524 = vmatprep.subr.mxu0 0.0
    %525 = vmatpush1.msra.mxu0 0.0
    %526 = vmatprep.subr.mxu0 0.0
    %527 = vmatpush1.msra.mxu0 0.0
    %528 = vmatprep.subr.mxu0 0.0
    %529 = vmatpush1.msra.mxu0 0.0
    %530 = vmatprep.subr.mxu0 0.0
    %531 = vmatpush1.msra.mxu0 0.0
    %532 = vmatprep.subr.mxu0 0.0
    %533 = vmatpush1.msra.mxu0 0.0
    %534 = vmatprep.subr.mxu0 0.0
    %535 = vmatpush1.msra.mxu0 0.0
    %536 = vmatprep.subr.mxu0 0.0
    %537 = vmatpush1.msra.mxu0 0.0
    %538 = vmatprep.subr.mxu0 0.0
    %539 = vmatpush1.msra.mxu0 0.0
    %540 = vmatprep.subr.mxu0 0.0
    %541 = vmatpush1.msra.mxu0 0.0
    %542 = vmatprep.subr.mxu0 0.0
    %543 = vmatpush1.msra.mxu0 0.0
    %544 = vmatprep.subr.mxu0 0.0
    %545 = vmatpush1.msra.mxu0 0.0
    %546 = vmatprep.subr.mxu0 0.0
    %547 = vmatpush1.msra.mxu0 0.0
    %548 = vmatprep.subr.mxu0 0.0
    %549 = vmatpush1.msra.mxu0 0.0
    %550 = vmatprep.subr.mxu0 0.0
    %551 = vmatpush1.msra.mxu0 0.0
    %552 = vmatprep.subr.mxu0 0.0
    %553 = vmatpush1.msra.mxu0 0.0
    %554 = vmatprep.mubr.f32.mxu0 0.0
    %555 = vmatmul.mubr.f32.gmra.mrb[0].mxu0 %v488
    %v556 = vpop.f32.mrb[0].mxu0
    %v557 = vadd.f32 %v484, %v556
    %v558 = vpop.f32.mrb[0].mxu0
    %559 = vdwg.mxu0
    %v560 = vmax.f32 %v557, 0.0
    %v561 = vld [vmem:[%s15] sm:$0x1]
    %v563 = vlaneseq
    %v564 = vshrl.u32 %v563, 7
    %v565 = vsub.s32 0, %v564
    %v566 = vrot.slane %v561, %v565
    %v568 = vmul.f32 %v560, %v566
    %v569 = vsel %vm381, %v568, 0.0
    %570 = vadd.xlane.f32.xlu0 %v569
    %v571 = vpop.xlane.xlu0 %570
    %v572 = vld [vmem:[#allocation4] sm:$0x1]
    %v574 = vlaneseq
    %v575 = vshrl.u32 %v574, 7
    %v576 = vsub.s32 0, %v575
    %v577 = vrot.slane %v572, %v576
    %v579 = vadd.f32 %v571, %v577
    %581 = vrot.lane.b32.xlu0 %v579, 1
    %v582 = vpop.permute.xlu0 %581
    %vm584 = vcmask 7168
    %v585 = vsel %vm584, %v474, %v582
    %vm586 = vcmask 15360
    %587 = vst.msk [vmem:[%s17] sm:$0xff] %vm586, %v585
  $region77: #{critic_forward.1} parent=0 // pred_fallthru
    _
  // Predicated region
  $region78: #{critic_forward.1} parent=0 // pred_check
    _
  $region79: #{critic_forward.1} parent=0 // pred_check_branch
    %589 = sbr.rel (0) target = $region81
  $region80: #{critic_forward.1} parent=0 // pred_region
    _
  $region81: #{critic_forward.1} parent=0 // pred_fallthru
    _
  // Predicated region
  $region82: #{critic_forward.1} parent=0 // pred_check
    _
  $region83: #{critic_forward.1} parent=0 // pred_check_branch
    %591 = sbr.rel (0) target = $region85
  $region84: #{critic_forward.1} parent=0 // pred_region
    _
  $region85: #{critic_forward.1} parent=0 // pred_fallthru
    _

</llo_original>
